<compile_context>
chip_gen: v7x
topology: tpu7x:2x2x1
jax: 0.10.0
libtpu: 0.0.40
codegen_flags: <defaults>
</compile_context>

<pallas_src>
import jax
import jax.numpy as jnp
from jax.experimental import pallas as pl
from jax.experimental.pallas import tpu as pltpu

STATE_SIZE = 8       # LunarLander-v3 observation dim
ACTION_SIZE = 4      # LunarLander-v3 action dim
H1 = 256
H2 = 128
OUT_PAD = 8          # fc3 output padded to the sublane multiple only (4 -> 8), not 128

_B1_OFF = 0
_B2_OFF = H1
_B3_OFF = H1 + H2    # packed bias buffer: [b1 (256) | b2 (128) | b3_pad (8)] = (1, 392)

MAX_TM = 2048        # per-grid-step batch tile cap (keeps intermediates a few MB of VMEM)
PALLAS_MIN_BATCH = 128  # below this, the XLA dense path wins (launch/pipeline fixed cost)


def qnetwork_kernel(x_ref, w1_ref, w2_ref, w3_ref, b_ref, o_ref):
    # One batch tile per grid step; weights / packed biases are VMEM-resident.
    x = x_ref[...].astype(jnp.bfloat16)

    b1 = b_ref[:, _B1_OFF:_B1_OFF + H1]          # (1, 256) f32
    b2 = b_ref[:, _B2_OFF:_B2_OFF + H2]          # (1, 128) f32
    b3 = b_ref[:, _B3_OFF:_B3_OFF + OUT_PAD]     # (1, 8)   f32 (cols 4.. are zero)

    # fc1 + ReLU: bf16 MXU matmul, f32 accumulate, bias+ReLU on the VPU in f32.
    h1 = jnp.dot(x, w1_ref[...], preferred_element_type=jnp.float32)
    h1 = jnp.maximum(h1 + b1, 0.0)
    # fc2 + ReLU
    h2 = jnp.dot(h1.astype(jnp.bfloat16), w2_ref[...], preferred_element_type=jnp.float32)
    h2 = jnp.maximum(h2 + b2, 0.0)
    # fc3: narrow (TM, 8) output -> 16x less HBM writeback than a 128-wide padded store.
    out = jnp.dot(h2.astype(jnp.bfloat16), w3_ref[...], preferred_element_type=jnp.float32)
    o_ref[...] = (out + b3).astype(o_ref.dtype)


def _round_up(n, m):
    return ((n + m - 1) // m) * m


def _num_tensorcores():
    """2 grid steps on v7x (2 TCs/chip), 1 on single-TC chips (v5e/v6e). Robust fallback."""
    try:
        kind = jax.devices()[0].device_kind.lower()
        if "v7" in kind or "tpu7" in kind:
            return 2
    except Exception:
        pass
    return 1


def pack_params(params):
    """Convert raw f32 (w, b) pairs into kernel layout:
    bf16 weights, fc3 zero-padded to OUT_PAD (=8) columns, biases packed into one f32 buffer."""
    w1, b1, w2, b2, w3, b3 = params
    w3p = jnp.zeros((H2, OUT_PAD), jnp.float32).at[:, :ACTION_SIZE].set(w3)
    b3p = jnp.zeros((1, OUT_PAD), jnp.float32).at[:, :ACTION_SIZE].set(b3)
    bpack = jnp.concatenate([b1, b2, b3p], axis=-1)           # (1, 392) f32
    return (w1.astype(jnp.bfloat16),
            w2.astype(jnp.bfloat16),
            w3p.astype(jnp.bfloat16),
            bpack)


def qnetwork_forward(x, packed_params, *, num_grid_steps=None, max_tm=MAX_TM):
    """Pallas path. x: (B, STATE_SIZE) f32 -> (B, ACTION_SIZE) f32."""
    w1, w2, w3p, bpack = packed_params
    B = x.shape[0]

    steps = num_grid_steps if num_grid_steps is not None else _num_tensorcores()
    per_step = -(-B // steps)                         # ceil(B / steps)
    tm_eff = min(max_tm, _round_up(per_step, 8))      # tile = whole per-TC share (<= cap)
    b_pad = _round_up(B, tm_eff)                      # pad only up to the tile size
    if b_pad != B:
        x = jnp.pad(x, ((0, b_pad - B), (0, 0)))

    resident = lambda shape: pl.BlockSpec(shape, lambda i: (0, 0))
    out_padded = pl.pallas_call(
        qnetwork_kernel,
        out_shape=jax.ShapeDtypeStruct((b_pad, OUT_PAD), jnp.float32),
        grid=(b_pad // tm_eff,),
        in_specs=[
            pl.BlockSpec((tm_eff, STATE_SIZE), lambda i: (i, 0)),   # batch-tiled x
            resident(w1.shape),
            resident(w2.shape),
            resident(w3p.shape),
            resident(bpack.shape),
        ],
        out_specs=pl.BlockSpec((tm_eff, OUT_PAD), lambda i: (i, 0)),
        compiler_params=pltpu.CompilerParams(
            dimension_semantics=("parallel",)),       # shard batch across the 2 TCs on v7x
    )(x, w1, w2, w3p, bpack)
    # (b_pad, 8) -> (B, 4): slice is now over the narrow output, no wide-buffer extra pass.
    return out_padded[:B, :ACTION_SIZE]


def qnetwork_forward_dense(x, params):
    """Small-batch (acting) path: fused XLA dense; kernel fixed cost dominates below ~128 rows."""
    w1, b1, w2, b2, w3, b3 = params
    h1 = jnp.maximum(x @ w1 + b1, 0.0)
    h2 = jnp.maximum(h1 @ w2 + b2, 0.0)
    return h2 @ w3 + b3


def qnetwork_forward_auto(x, params, packed_params):
    """Dispatch: XLA dense for small batches, Pallas kernel for replay/training batches."""
    if x.shape[0] < PALLAS_MIN_BATCH:
        return qnetwork_forward_dense(x, params)
    return qnetwork_forward(x, packed_params)


def init_params(key):
    """Deterministic init matching nn.Linear default (uniform +/- 1/sqrt(fan_in))."""
    ks = jax.random.split(key, 6)

    def linear(kw, kb, fan_in, fan_out):
        bound = 1.0 / jnp.sqrt(fan_in)
        w = jax.random.uniform(kw, (fan_in, fan_out), jnp.float32, -bound, bound)
        b = jax.random.uniform(kb, (1, fan_out), jnp.float32, -bound, bound)
        return w, b

    w1, b1 = linear(ks[0], ks[1], STATE_SIZE, H1)
    w2, b2 = linear(ks[2], ks[3], H1, H2)
    w3, b3 = linear(ks[4], ks[5], H2, ACTION_SIZE)
    return (w1, b1, w2, b2, w3, b3)


def reference_forward(x, params):
    w1, b1, w2, b2, w3, b3 = params
    h1 = jnp.maximum(x @ w1 + b1, 0.0)
    h2 = jnp.maximum(h1 @ w2 + b2, 0.0)
    return h2 @ w3 + b3


def reference_forward_bf16(x, params):
    """Reference that mirrors the kernel's bf16-operand / f32-accumulate matmuls."""
    w1, b1, w2, b2, w3, b3 = params
    bf = jnp.bfloat16
    h1 = jnp.maximum(
        jnp.dot(x.astype(bf), w1.astype(bf), preferred_element_type=jnp.float32) + b1, 0.0)
    h2 = jnp.maximum(
        jnp.dot(h1.astype(bf), w2.astype(bf), preferred_element_type=jnp.float32) + b2, 0.0)
    return jnp.dot(h2.astype(bf), w3.astype(bf), preferred_element_type=jnp.float32) + b3


if __name__ == "__main__":
    key = jax.random.PRNGKey(0)
    k_params, k_x = jax.random.split(key)
    params = init_params(k_params)
    packed = pack_params(params)

    # Replay-path batch; 200 is not a tile multiple on v7x, exercising the batch-pad path.
    batch = 200
    x = jax.random.normal(k_x, (batch, STATE_SIZE), jnp.float32)

    fwd = jax.jit(lambda xx, pp: qnetwork_forward(xx, pp))
    out = jax.block_until_ready(fwd(x, packed))
    assert out.shape == (batch, ACTION_SIZE)

    ref_bf16 = reference_forward_bf16(x, params)
    ref_f32 = reference_forward(x, params)
    assert jnp.allclose(out, ref_bf16, atol=2e-3, rtol=2e-3)
    assert jnp.allclose(out, ref_f32, atol=5e-2, rtol=5e-2)

    # Tiny acting-path batch goes through the XLA dense path.
    x_small = x[:8]
    out_small = jax.block_until_ready(jax.jit(qnetwork_forward_dense)(x_small, params))
    assert jnp.allclose(out_small, ref_f32[:8], atol=1e-4, rtol=1e-4)

    print("KERNEL_OK")
</pallas_src>

<mosaic_0001>
module attributes {stable_mosaic.version = 11 : i64} {
  func.func @qnetwork_kernel(%arg0: i32, %arg1: memref<200x8xf32, #tpu.memory_space<vmem>>, %arg2: memref<8x256xbf16, #tpu.memory_space<vmem>>, %arg3: memref<256x128xbf16, #tpu.memory_space<vmem>>, %arg4: memref<128x8xbf16, #tpu.memory_space<vmem>>, %arg5: memref<1x392xf32, #tpu.memory_space<vmem>>, %arg6: memref<200x8xf32, #tpu.memory_space<vmem>>) attributes {dimension_semantics = [#tpu.dimension_semantics<parallel>], iteration_bounds = array<i64: 1>, scalar_prefetch = 0 : i64, scratch_operands = 0 : i64, tpu.core_type = #tpu.core_type<tc>, window_params = [{transform_indices = @transform_0, window_bounds = array<i64: 200, 8>}, {pipeline_mode = #tpu.pipeline_mode<synchronous>, transform_indices = @transform_1, window_bounds = array<i64: 8, 256>}, {pipeline_mode = #tpu.pipeline_mode<synchronous>, transform_indices = @transform_2, window_bounds = array<i64: 256, 128>}, {pipeline_mode = #tpu.pipeline_mode<synchronous>, transform_indices = @transform_3, window_bounds = array<i64: 128, 8>}, {pipeline_mode = #tpu.pipeline_mode<synchronous>, transform_indices = @transform_4, window_bounds = array<i64: 1, 392>}, {transform_indices = @transform_5, window_bounds = array<i64: 200, 8>}]} {
    %c0 = arith.constant 0 : index
    %c0_0 = arith.constant 0 : index
    %0 = vector.load %arg1[%c0, %c0_0] : memref<200x8xf32, #tpu.memory_space<vmem>>, vector<200x8xf32>
    %1 = arith.truncf %0 : vector<200x8xf32> to vector<200x8xbf16>
    %c0_1 = arith.constant 0 : index
    %c0_2 = arith.constant 0 : index
    %2 = vector.load %arg5[%c0_1, %c0_2] : memref<1x392xf32, #tpu.memory_space<vmem>>, vector<1x256xf32>
    %c0_3 = arith.constant 0 : index
    %c256 = arith.constant 256 : index
    %3 = vector.load %arg5[%c0_3, %c256] : memref<1x392xf32, #tpu.memory_space<vmem>>, vector<1x128xf32>
    %c0_4 = arith.constant 0 : index
    %c384 = arith.constant 384 : index
    %4 = vector.load %arg5[%c0_4, %c384] : memref<1x392xf32, #tpu.memory_space<vmem>>, vector<1x8xf32>
    %c0_5 = arith.constant 0 : index
    %c0_6 = arith.constant 0 : index
    %5 = vector.load %arg2[%c0_5, %c0_6] : memref<8x256xbf16, #tpu.memory_space<vmem>>, vector<8x256xbf16>
    %cst = arith.constant dense<0.000000e+00> : vector<200x256xf32>
    %6 = tpu.matmul %1, %5, %cst {dimension_numbers = #tpu.dot_dimension_numbers<[1], [0], [0], [1], [0, 0, 1, 1], [], []>} : vector<200x8xbf16>, vector<8x256xbf16>, vector<200x256xf32> -> vector<200x256xf32>
    %7 = vector.broadcast %2 : vector<1x256xf32> to vector<200x256xf32>
    %8 = arith.addf %6, %7 : vector<200x256xf32>
    %cst_7 = arith.constant 0.000000e+00 : f32
    %9 = vector.broadcast %cst_7 : f32 to vector<200x256xf32>
    %10 = arith.maximumf %8, %9 : vector<200x256xf32>
    %11 = arith.truncf %10 : vector<200x256xf32> to vector<200x256xbf16>
    %c0_8 = arith.constant 0 : index
    %c0_9 = arith.constant 0 : index
    %12 = vector.load %arg3[%c0_8, %c0_9] : memref<256x128xbf16, #tpu.memory_space<vmem>>, vector<256x128xbf16>
    %cst_10 = arith.constant dense<0.000000e+00> : vector<200x128xf32>
    %13 = tpu.matmul %11, %12, %cst_10 {dimension_numbers = #tpu.dot_dimension_numbers<[1], [0], [0], [1], [0, 0, 1, 1], [], []>} : vector<200x256xbf16>, vector<256x128xbf16>, vector<200x128xf32> -> vector<200x128xf32>
    %14 = vector.broadcast %3 : vector<1x128xf32> to vector<200x128xf32>
    %15 = arith.addf %13, %14 : vector<200x128xf32>
    %cst_11 = arith.constant 0.000000e+00 : f32
    %16 = vector.broadcast %cst_11 : f32 to vector<200x128xf32>
    %17 = arith.maximumf %15, %16 : vector<200x128xf32>
    %18 = arith.truncf %17 : vector<200x128xf32> to vector<200x128xbf16>
    %c0_12 = arith.constant 0 : index
    %c0_13 = arith.constant 0 : index
    %19 = vector.load %arg4[%c0_12, %c0_13] : memref<128x8xbf16, #tpu.memory_space<vmem>>, vector<128x8xbf16>
    %cst_14 = arith.constant dense<0.000000e+00> : vector<200x8xf32>
    %20 = tpu.matmul %18, %19, %cst_14 {dimension_numbers = #tpu.dot_dimension_numbers<[1], [0], [0], [1], [0, 0, 1, 1], [], []>} : vector<200x128xbf16>, vector<128x8xbf16>, vector<200x8xf32> -> vector<200x8xf32>
    %21 = vector.broadcast %4 : vector<1x8xf32> to vector<200x8xf32>
    %22 = arith.addf %20, %21 : vector<200x8xf32>
    %c0_15 = arith.constant 0 : index
    %c0_16 = arith.constant 0 : index
    %23 = vector.load %arg6[%c0_15, %c0_16] : memref<200x8xf32, #tpu.memory_space<vmem>>, vector<200x8xf32>
    tpu.vector_store %arg6[%c0_15, %c0_16], %22 {strides = array<i32>} : memref<200x8xf32, #tpu.memory_space<vmem>>, vector<200x8xf32>,
    return
  }
  func.func @transform_0(%arg0: i32) -> (i32, i32) {
    %c0_i32 = arith.constant 0 : i32
    %c0_i32_0 = arith.constant 0 : i32
    return %arg0, %c0_i32 : i32, i32
  }
  func.func @transform_1(%arg0: i32) -> (i32, i32) {
    %c0_i32 = arith.constant 0 : i32
    %c0_i32_0 = arith.constant 0 : i32
    %c0_i32_1 = arith.constant 0 : i32
    return %c0_i32, %c0_i32_0 : i32, i32
  }
  func.func @transform_2(%arg0: i32) -> (i32, i32) {
    %c0_i32 = arith.constant 0 : i32
    %c0_i32_0 = arith.constant 0 : i32
    %c0_i32_1 = arith.constant 0 : i32
    return %c0_i32, %c0_i32_0 : i32, i32
  }
  func.func @transform_3(%arg0: i32) -> (i32, i32) {
    %c0_i32 = arith.constant 0 : i32
    %c0_i32_0 = arith.constant 0 : i32
    %c0_i32_1 = arith.constant 0 : i32
    return %c0_i32, %c0_i32_0 : i32, i32
  }
  func.func @transform_4(%arg0: i32) -> (i32, i32) {
    %c0_i32 = arith.constant 0 : i32
    %c0_i32_0 = arith.constant 0 : i32
    %c0_i32_1 = arith.constant 0 : i32
    return %c0_i32, %c0_i32_0 : i32, i32
  }
  func.func @transform_5(%arg0: i32) -> (i32, i32) {
    %c0_i32 = arith.constant 0 : i32
    %c0_i32_0 = arith.constant 0 : i32
    return %arg0, %c0_i32 : i32, i32
  }
}

</mosaic_0001>

<llo_original>
// kernel: _lambda_.1
$region0: #{_lambda_.1}
  #allocation0 [shape = 'u32[]', space=smem, size = 0x4, offset = 0x4, fixed_abs, tag = 'smem constant byte address 0x4 - core index']
  #allocation1 [shape = 'u32[144,128]{1,0:T(1,128)}', space=vmem, size = 0x12000, scoped, tag = 'internal scratch']
  %s0 = inlined_call_operand.vmem [shape: f32[200,8], index: 0, kind: input, shape index: {}]
  %s1 = inlined_call_operand.vmem [shape: bf16[8,256], index: 1, kind: input, shape index: {}]
  %s2 = inlined_call_operand.vmem [shape: bf16[256,128], index: 2, kind: input, shape index: {}]
  %s3 = inlined_call_operand.vmem [shape: bf16[128,8], index: 3, kind: input, shape index: {}]
  %s4 = inlined_call_operand.vmem [shape: f32[1,392], index: 4, kind: input, shape index: {}]
  %s5 = inlined_call_operand.vmem [shape: f32[200,8], index: 5, kind: output, shape index: {}]
  %s6 = sld [smem:[#allocation0]]
  $region30: #{_lambda_.1} parent=0
    _
  %s8 = ssub.s32 1, %s6
  %s9 = scalar_select 0, %s8, %s6
  // Predicated region
  $region2: #{_lambda_.1} parent=0 // pred_check
    _
  $region3: #{_lambda_.1} parent=0 // pred_check_branch
    %11 = sbr.rel (0) target = $region5
  $region4: #{_lambda_.1} parent=0 // pred_region
    _
  $region5: #{_lambda_.1} parent=0 // pred_fallthru
    _
  // Predicated region
  $region6: #{_lambda_.1} parent=0 // pred_check
    _
  $region7: #{_lambda_.1} parent=0 // pred_check_branch
    %13 = sbr.rel (0) target = $region9
  $region8: #{_lambda_.1} parent=0 // pred_region
    _
  $region9: #{_lambda_.1} parent=0 // pred_fallthru
    _
  // Predicated region
  $region10: #{_lambda_.1} parent=0 // pred_check
    _
  $region11: #{_lambda_.1} parent=0 // pred_check_branch
    %15 = sbr.rel (0) target = $region13
  $region12: #{_lambda_.1} parent=0 // pred_region
    _
  $region13: #{_lambda_.1} parent=0 // pred_fallthru
    _
  // Predicated region
  $region14: #{_lambda_.1} parent=0 // pred_check
    _
  $region15: #{_lambda_.1} parent=0 // pred_check_branch
    %17 = sbr.rel (0) target = $region17
  $region16: #{_lambda_.1} parent=0 // pred_region
    _
  $region17: #{_lambda_.1} parent=0 // pred_fallthru
    _
  // Predicated region
  $region18: #{_lambda_.1} parent=0 // pred_check
    _
  $region19: #{_lambda_.1} parent=0 // pred_check_branch
    %19 = sbr.rel (0) target = $region21
  $region20: #{_lambda_.1} parent=0 // pred_region
    _
  $region21: #{_lambda_.1} parent=0 // pred_fallthru
    _
  %v21 = vld [vmem:[%s0] sm:$0xff]
  %v22 = vld [vmem:[%s0 + $0x8] sm:$0xff]
  %v23 = vld [vmem:[%s0 + $0x10] sm:$0xff]
  %v24 = vld [vmem:[%s0 + $0x18] sm:$0xff]
  %v25 = vld [vmem:[%s0 + $0x20] sm:$0xff]
  %v26 = vld [vmem:[%s0 + $0x28] sm:$0xff]
  %v27 = vld [vmem:[%s0 + $0x30] sm:$0xff]
  %v28 = vld [vmem:[%s0 + $0x38] sm:$0xff]
  %v29 = vld [vmem:[%s0 + $0x40] sm:$0xff]
  %v30 = vld [vmem:[%s0 + $0x48] sm:$0xff]
  %v31 = vld [vmem:[%s0 + $0x50] sm:$0xff]
  %v32 = vld [vmem:[%s0 + $0x58] sm:$0xff]
  %v33 = vld [vmem:[%s0 + $0x60] sm:$0xff]
  %v34 = vld [vmem:[%s0 + $0x68] sm:$0xff]
  %v35 = vld [vmem:[%s0 + $0x70] sm:$0xff]
  %v36 = vld [vmem:[%s0 + $0x78] sm:$0xff]
  %v37 = vld [vmem:[%s0 + $0x80] sm:$0xff]
  %v38 = vld [vmem:[%s0 + $0x88] sm:$0xff]
  %v39 = vld [vmem:[%s0 + $0x90] sm:$0xff]
  %v40 = vld [vmem:[%s0 + $0x98] sm:$0xff]
  %v41 = vld [vmem:[%s0 + $0xa0] sm:$0xff]
  %v42 = vld [vmem:[%s0 + $0xa8] sm:$0xff]
  %v43 = vld [vmem:[%s0 + $0xb0] sm:$0xff]
  %v44 = vld [vmem:[%s0 + $0xb8] sm:$0xff]
  %v45 = vld [vmem:[%s0 + $0xc0] sm:$0xff]
  %v46 = vpack.c.bf16 %v22, %v21
  %v47 = vpack.c.bf16 %v24, %v23
  %v48 = vpack.c.bf16 %v26, %v25
  %v49 = vpack.c.bf16 %v28, %v27
  %v50 = vpack.c.bf16 %v30, %v29
  %v51 = vpack.c.bf16 %v32, %v31
  %v52 = vpack.c.bf16 %v34, %v33
  %v53 = vpack.c.bf16 %v36, %v35
  %v54 = vpack.c.bf16 %v38, %v37
  %v55 = vpack.c.bf16 %v40, %v39
  %v56 = vpack.c.bf16 %v42, %v41
  %v57 = vpack.c.bf16 %v44, %v43
  %v58 = vpack.c.bf16 %v45, %v45
  %v59 = vld [vmem:[%s4] sm:$0x3]
  %v60 = vld [vmem:[%s4 + $0x2] sm:$0x1]
  %v61 = vld [vmem:[%s4 + $0x3] sm:$0x1]
  %v62 = vld [vmem:[%s1] sm:$0xff]
  %v64 = vlaneseq
  %v65 = vshrl.u32 %v64, 7
  %v66 = vsub.s32 0, %v65
  %v67 = vrot.slane %v59, %v66
  %v68 = vlaneseq
  %v69 = vshrl.u32 %v68, 7
  %v70 = vsub.s32 1, %v69
  %v71 = vrot.slane %v59, %v70
  %v75 = vunpack.c.l.b16 %v62
  %v76 = vunpack.c.h.b16 %v62
  %v77 = vpack.c.b16 %v75, %v75
  %v78 = vpack.c.b16 %v76, %v76
  %vm79 = vcmask 64512
  %v81 = vsel %vm79, %v46, 0
  %v84 = vsel %vm79, %v47, 0
  %v87 = vsel %vm79, %v48, 0
  %v90 = vsel %vm79, %v49, 0
  %v93 = vsel %vm79, %v50, 0
  %v96 = vsel %vm79, %v51, 0
  %v99 = vsel %vm79, %v52, 0
  %v102 = vsel %vm79, %v53, 0
  %v105 = vsel %vm79, %v54, 0
  %v108 = vsel %vm79, %v55, 0
  %v111 = vsel %vm79, %v56, 0
  %v114 = vsel %vm79, %v57, 0
  %v117 = vsel %vm79, %v58, 0
  %vm119 = vcmask 1043456
  %v121 = vsel %vm119, %v77, 0
  %v124 = vsel %vm119, %v78, 0
  %126 = vmatprep.subr.bf16.mxu0 %v124
  %127 = vmatpush1.bf16.msra.mxu0 %v121
  %128 = vmatprep.subr.bf16.mxu0 0
  %129 = vmatpush1.bf16.msra.mxu0 0
  %130 = vmatprep.subr.bf16.mxu0 0
  %131 = vmatpush1.bf16.msra.mxu0 0
  %132 = vmatprep.subr.bf16.mxu0 0
  %133 = vmatpush1.bf16.msra.mxu0 0
  %134 = vmatprep.subr.bf16.mxu0 0
  %135 = vmatpush1.bf16.msra.mxu0 0
  %136 = vmatprep.subr.bf16.mxu0 0
  %137 = vmatpush1.bf16.msra.mxu0 0
  %138 = vmatprep.subr.bf16.mxu0 0
  %139 = vmatpush1.bf16.msra.mxu0 0
  %140 = vmatprep.subr.bf16.mxu0 0
  %141 = vmatpush1.bf16.msra.mxu0 0
  %142 = vmatprep.subr.bf16.mxu0 0
  %143 = vmatpush1.bf16.msra.mxu0 0
  %144 = vmatprep.subr.bf16.mxu0 0
  %145 = vmatpush1.bf16.msra.mxu0 0
  %146 = vmatprep.subr.bf16.mxu0 0
  %147 = vmatpush1.bf16.msra.mxu0 0
  %148 = vmatprep.subr.bf16.mxu0 0
  %149 = vmatpush1.bf16.msra.mxu0 0
  %150 = vmatprep.subr.bf16.mxu0 0
  %151 = vmatpush1.bf16.msra.mxu0 0
  %152 = vmatprep.subr.bf16.mxu0 0
  %153 = vmatpush1.bf16.msra.mxu0 0
  %154 = vmatprep.subr.bf16.mxu0 0
  %155 = vmatpush1.bf16.msra.mxu0 0
  %156 = vmatprep.subr.bf16.mxu0 0
  %157 = vmatpush1.bf16.msra.mxu0 0
  %158 = vmatprep.mubr.bf16.mxu0 0
  %159 = vmatmul.mubr.bf16.gmra.mrb[0].mxu0 %v81
  %v160 = vpop.f32.mrb[0].mxu0
  %v161 = vadd.f32 %v67, %v160
  %v162 = vpop.f32.mrb[0].mxu0
  %v163 = vadd.f32 %v71, %v162
  %v164 = vpop.f32.mrb[0].mxu0
  %v165 = vadd.f32 %v67, %v164
  %v166 = vpop.f32.mrb[0].mxu0
  %v167 = vadd.f32 %v71, %v166
  %168 = vmatprep.mubr.bf16.mxu0 0
  %169 = vmatmul.mubr.bf16.gmra.mrb[0].mxu0 %v84
  %v170 = vpop.f32.mrb[0].mxu0
  %v171 = vadd.f32 %v67, %v170
  %v172 = vpop.f32.mrb[0].mxu0
  %v173 = vadd.f32 %v71, %v172
  %v174 = vpop.f32.mrb[0].mxu0
  %v175 = vadd.f32 %v67, %v174
  %v176 = vpop.f32.mrb[0].mxu0
  %v177 = vadd.f32 %v71, %v176
  %178 = vmatprep.mubr.bf16.mxu0 0
  %179 = vmatmul.mubr.bf16.gmra.mrb[0].mxu0 %v87
  %v180 = vpop.f32.mrb[0].mxu0
  %v181 = vadd.f32 %v67, %v180
  %v182 = vpop.f32.mrb[0].mxu0
  %v183 = vadd.f32 %v71, %v182
  %v184 = vpop.f32.mrb[0].mxu0
  %v185 = vadd.f32 %v67, %v184
  %v186 = vpop.f32.mrb[0].mxu0
  %v187 = vadd.f32 %v71, %v186
  %188 = vmatprep.mubr.bf16.mxu0 0
  %189 = vmatmul.mubr.bf16.gmra.mrb[0].mxu0 %v90
  %v190 = vpop.f32.mrb[0].mxu0
  %v191 = vadd.f32 %v67, %v190
  %v192 = vpop.f32.mrb[0].mxu0
  %v193 = vadd.f32 %v71, %v192
  %v194 = vpop.f32.mrb[0].mxu0
  %v195 = vadd.f32 %v67, %v194
  %v196 = vpop.f32.mrb[0].mxu0
  %v197 = vadd.f32 %v71, %v196
  %198 = vmatprep.mubr.bf16.mxu0 0
  %199 = vmatmul.mubr.bf16.gmra.mrb[0].mxu0 %v93
  %v200 = vpop.f32.mrb[0].mxu0
  %v201 = vadd.f32 %v67, %v200
  %v202 = vpop.f32.mrb[0].mxu0
  %v203 = vadd.f32 %v71, %v202
  %v204 = vpop.f32.mrb[0].mxu0
  %v205 = vadd.f32 %v67, %v204
  %v206 = vpop.f32.mrb[0].mxu0
  %v207 = vadd.f32 %v71, %v206
  %208 = vmatprep.mubr.bf16.mxu0 0
  %209 = vmatmul.mubr.bf16.gmra.mrb[0].mxu0 %v96
  %v210 = vpop.f32.mrb[0].mxu0
  %v211 = vadd.f32 %v67, %v210
  %v212 = vpop.f32.mrb[0].mxu0
  %v213 = vadd.f32 %v71, %v212
  %v214 = vpop.f32.mrb[0].mxu0
  %v215 = vadd.f32 %v67, %v214
  %v216 = vpop.f32.mrb[0].mxu0
  %v217 = vadd.f32 %v71, %v216
  %218 = vmatprep.mubr.bf16.mxu0 0
  %219 = vmatmul.mubr.bf16.gmra.mrb[0].mxu0 %v99
  %v220 = vpop.f32.mrb[0].mxu0
  %v221 = vadd.f32 %v67, %v220
  %v222 = vpop.f32.mrb[0].mxu0
  %v223 = vadd.f32 %v71, %v222
  %v224 = vpop.f32.mrb[0].mxu0
  %v225 = vadd.f32 %v67, %v224
  %v226 = vpop.f32.mrb[0].mxu0
  %v227 = vadd.f32 %v71, %v226
  %228 = vmatprep.mubr.bf16.mxu0 0
  %229 = vmatmul.mubr.bf16.gmra.mrb[0].mxu0 %v102
  %v230 = vpop.f32.mrb[0].mxu0
  %v231 = vadd.f32 %v67, %v230
  %v232 = vpop.f32.mrb[0].mxu0
  %v233 = vadd.f32 %v71, %v232
  %v234 = vpop.f32.mrb[0].mxu0
  %v235 = vadd.f32 %v67, %v234
  %v236 = vpop.f32.mrb[0].mxu0
  %v237 = vadd.f32 %v71, %v236
  %238 = vmatprep.mubr.bf16.mxu0 0
  %239 = vmatmul.mubr.bf16.gmra.mrb[0].mxu0 %v105
  %v240 = vpop.f32.mrb[0].mxu0
  %v241 = vadd.f32 %v67, %v240
  %v242 = vpop.f32.mrb[0].mxu0
  %v243 = vadd.f32 %v71, %v242
  %v244 = vpop.f32.mrb[0].mxu0
  %v245 = vadd.f32 %v67, %v244
  %v246 = vpop.f32.mrb[0].mxu0
  %v247 = vadd.f32 %v71, %v246
  %248 = vmatprep.mubr.bf16.mxu0 0
  %249 = vmatmul.mubr.bf16.gmra.mrb[0].mxu0 %v108
  %v250 = vpop.f32.mrb[0].mxu0
  %v251 = vadd.f32 %v67, %v250
  %v252 = vpop.f32.mrb[0].mxu0
  %v253 = vadd.f32 %v71, %v252
  %v254 = vpop.f32.mrb[0].mxu0
  %v255 = vadd.f32 %v67, %v254
  %v256 = vpop.f32.mrb[0].mxu0
  %v257 = vadd.f32 %v71, %v256
  %258 = vmatprep.mubr.bf16.mxu0 0
  %259 = vmatmul.mubr.bf16.gmra.mrb[0].mxu0 %v111
  %v260 = vpop.f32.mrb[0].mxu0
  %v261 = vadd.f32 %v67, %v260
  %v262 = vpop.f32.mrb[0].mxu0
  %v263 = vadd.f32 %v71, %v262
  %v264 = vpop.f32.mrb[0].mxu0
  %v265 = vadd.f32 %v67, %v264
  %v266 = vpop.f32.mrb[0].mxu0
  %v267 = vadd.f32 %v71, %v266
  %268 = vmatprep.mubr.bf16.mxu0 0
  %269 = vmatmul.mubr.bf16.gmra.mrb[0].mxu0 %v114
  %v270 = vpop.f32.mrb[0].mxu0
  %v271 = vadd.f32 %v67, %v270
  %v272 = vpop.f32.mrb[0].mxu0
  %v273 = vadd.f32 %v71, %v272
  %v274 = vpop.f32.mrb[0].mxu0
  %v275 = vadd.f32 %v67, %v274
  %v276 = vpop.f32.mrb[0].mxu0
  %v277 = vadd.f32 %v71, %v276
  %278 = vmatprep.mubr.bf16.mxu0 0
  %279 = vmatmul.mubr.bf16.gmra.mrb[0].mxu0 %v117
  %v280 = vpop.f32.mrb[0].mxu0
  %v281 = vadd.f32 %v67, %v280
  %v282 = vpop.f32.mrb[0].mxu0
  %v283 = vadd.f32 %v71, %v282
  %v284 = vpop.f32.mrb[0].mxu0
  %v285 = vpop.f32.mrb[0].mxu0
  %286 = vdwg.mxu0
  %v287 = vmax.f32 %v161, 0.0
  %v288 = vmax.f32 %v163, 0.0
  %v289 = vmax.f32 %v165, 0.0
  %v290 = vmax.f32 %v167, 0.0
  %v291 = vmax.f32 %v171, 0.0
  %v292 = vmax.f32 %v173, 0.0
  %v293 = vmax.f32 %v175, 0.0
  %v294 = vmax.f32 %v177, 0.0
  %v295 = vmax.f32 %v181, 0.0
  %v296 = vmax.f32 %v183, 0.0
  %v297 = vmax.f32 %v185, 0.0
  %v298 = vmax.f32 %v187, 0.0
  %v299 = vmax.f32 %v191, 0.0
  %v300 = vmax.f32 %v193, 0.0
  %v301 = vmax.f32 %v195, 0.0
  %v302 = vmax.f32 %v197, 0.0
  %v303 = vmax.f32 %v201, 0.0
  %v304 = vmax.f32 %v203, 0.0
  %v305 = vmax.f32 %v205, 0.0
  %v306 = vmax.f32 %v207, 0.0
  %v307 = vmax.f32 %v211, 0.0
  %v308 = vmax.f32 %v213, 0.0
  %v309 = vmax.f32 %v215, 0.0
  %v310 = vmax.f32 %v217, 0.0
  %v311 = vmax.f32 %v221, 0.0
  %v312 = vmax.f32 %v223, 0.0
  %v313 = vmax.f32 %v225, 0.0
  %v314 = vmax.f32 %v227, 0.0
  %v315 = vmax.f32 %v231, 0.0
  %v316 = vmax.f32 %v233, 0.0
  %v317 = vmax.f32 %v235, 0.0
  %v318 = vmax.f32 %v237, 0.0
  %v319 = vmax.f32 %v241, 0.0
  %v320 = vmax.f32 %v243, 0.0
  %v321 = vmax.f32 %v245, 0.0
  %v322 = vmax.f32 %v247, 0.0
  %v323 = vmax.f32 %v251, 0.0
  %v324 = vmax.f32 %v253, 0.0
  %v325 = vmax.f32 %v255, 0.0
  %v326 = vmax.f32 %v257, 0.0
  %v327 = vmax.f32 %v261, 0.0
  %v328 = vmax.f32 %v263, 0.0
  %v329 = vmax.f32 %v265, 0.0
  %v330 = vmax.f32 %v267, 0.0
  %v331 = vmax.f32 %v271, 0.0
  %v332 = vmax.f32 %v273, 0.0
  %v333 = vmax.f32 %v275, 0.0
  %v334 = vmax.f32 %v277, 0.0
  %v335 = vmax.f32 %v281, 0.0
  %v336 = vmax.f32 %v283, 0.0
  %v337 = vpack.c.bf16 %v289, %v287
  %v338 = vpack.c.bf16 %v290, %v288
  %v339 = vpack.c.bf16 %v293, %v291
  %v340 = vpack.c.bf16 %v294, %v292
  %v341 = vpack.c.bf16 %v297, %v295
  %v342 = vpack.c.bf16 %v298, %v296
  %v343 = vpack.c.bf16 %v301, %v299
  %v344 = vpack.c.bf16 %v302, %v300
  %v345 = vpack.c.bf16 %v305, %v303
  %v346 = vpack.c.bf16 %v306, %v304
  %v347 = vpack.c.bf16 %v309, %v307
  %v348 = vpack.c.bf16 %v310, %v308
  %v349 = vpack.c.bf16 %v313, %v311
  %v350 = vpack.c.bf16 %v314, %v312
  %v351 = vpack.c.bf16 %v317, %v315
  %v352 = vpack.c.bf16 %v318, %v316
  %v353 = vpack.c.bf16 %v321, %v319
  %v354 = vpack.c.bf16 %v322, %v320
  %v355 = vpack.c.bf16 %v325, %v323
  %v356 = vpack.c.bf16 %v326, %v324
  %v357 = vpack.c.bf16 %v329, %v327
  %v358 = vpack.c.bf16 %v330, %v328
  %v359 = vpack.c.bf16 %v333, %v331
  %v360 = vpack.c.bf16 %v334, %v332
  %v361 = vpack.c.bf16 %v335, %v335
  %v362 = vpack.c.bf16 %v336, %v336
  %v363 = vld [vmem:[%s2] sm:$0xf]
  %v364 = vld [vmem:[%s2 + $0x4] sm:$0xf]
  %v365 = vld [vmem:[%s2 + $0x8] sm:$0xf]
  %v366 = vld [vmem:[%s2 + $0xc] sm:$0xf]
  %v367 = vld [vmem:[%s2 + $0x10] sm:$0xf]
  %v368 = vld [vmem:[%s2 + $0x14] sm:$0xf]
  %v369 = vld [vmem:[%s2 + $0x18] sm:$0xf]
  %v370 = vld [vmem:[%s2 + $0x1c] sm:$0xf]
  %v371 = vld [vmem:[%s2 + $0x20] sm:$0xf]
  %v372 = vld [vmem:[%s2 + $0x24] sm:$0xf]
  %v373 = vld [vmem:[%s2 + $0x28] sm:$0xf]
  %v374 = vld [vmem:[%s2 + $0x2c] sm:$0xf]
  %v375 = vld [vmem:[%s2 + $0x30] sm:$0xf]
  %v376 = vld [vmem:[%s2 + $0x34] sm:$0xf]
  %v377 = vld [vmem:[%s2 + $0x38] sm:$0xf]
  %v378 = vld [vmem:[%s2 + $0x3c] sm:$0xf]
  %v379 = vld [vmem:[%s2 + $0x40] sm:$0xf]
  %v380 = vld [vmem:[%s2 + $0x44] sm:$0xf]
  %v381 = vld [vmem:[%s2 + $0x48] sm:$0xf]
  %v382 = vld [vmem:[%s2 + $0x4c] sm:$0xf]
  %v383 = vld [vmem:[%s2 + $0x50] sm:$0xf]
  %v384 = vld [vmem:[%s2 + $0x54] sm:$0xf]
  %v385 = vld [vmem:[%s2 + $0x58] sm:$0xf]
  %v386 = vld [vmem:[%s2 + $0x5c] sm:$0xf]
  %v387 = vld [vmem:[%s2 + $0x60] sm:$0xf]
  %v388 = vld [vmem:[%s2 + $0x64] sm:$0xf]
  %v389 = vld [vmem:[%s2 + $0x68] sm:$0xf]
  %v390 = vld [vmem:[%s2 + $0x6c] sm:$0xf]
  %v391 = vld [vmem:[%s2 + $0x70] sm:$0xf]
  %v392 = vld [vmem:[%s2 + $0x74] sm:$0xf]
  %v393 = vld [vmem:[%s2 + $0x78] sm:$0xf]
  %v394 = vld [vmem:[%s2 + $0x7c] sm:$0xf]
  %v396 = vlaneseq
  %v397 = vshrl.u32 %v396, 7
  %v398 = vsub.s32 0, %v397
  %v399 = vrot.slane %v60, %v398
  %v433 = vunpack.c.l.b16 %v363
  %v434 = vunpack.c.l.b16 %v364
  %v435 = vunpack.c.l.b16 %v365
  %v436 = vunpack.c.l.b16 %v366
  %v437 = vunpack.c.l.b16 %v367
  %v438 = vunpack.c.l.b16 %v368
  %v439 = vunpack.c.l.b16 %v369
  %v440 = vunpack.c.l.b16 %v370
  %v441 = vunpack.c.l.b16 %v371
  %v442 = vunpack.c.l.b16 %v372
  %v443 = vunpack.c.l.b16 %v373
  %v444 = vunpack.c.l.b16 %v374
  %v445 = vunpack.c.l.b16 %v375
  %v446 = vunpack.c.l.b16 %v376
  %v447 = vunpack.c.l.b16 %v377
  %v448 = vunpack.c.l.b16 %v378
  %v449 = vunpack.c.l.b16 %v379
  %v450 = vunpack.c.l.b16 %v380
  %v451 = vunpack.c.l.b16 %v381
  %v452 = vunpack.c.l.b16 %v382
  %v453 = vunpack.c.l.b16 %v383
  %v454 = vunpack.c.l.b16 %v384
  %v455 = vunpack.c.l.b16 %v385
  %v456 = vunpack.c.l.b16 %v386
  %v457 = vunpack.c.l.b16 %v387
  %v458 = vunpack.c.l.b16 %v388
  %v459 = vunpack.c.l.b16 %v389
  %v460 = vunpack.c.l.b16 %v390
  %v461 = vunpack.c.l.b16 %v391
  %v462 = vunpack.c.l.b16 %v392
  %v463 = vunpack.c.l.b16 %v393
  %v464 = vunpack.c.l.b16 %v394
  %v465 = vpack.c.b16 %v434, %v433
  %v466 = vpack.c.b16 %v436, %v435
  %v467 = vpack.c.b16 %v438, %v437
  %v468 = vpack.c.b16 %v440, %v439
  %v469 = vpack.c.b16 %v442, %v441
  %v470 = vpack.c.b16 %v444, %v443
  %v471 = vpack.c.b16 %v446, %v445
  %v472 = vpack.c.b16 %v448, %v447
  %v473 = vpack.c.b16 %v450, %v449
  %v474 = vpack.c.b16 %v452, %v451
  %v475 = vpack.c.b16 %v454, %v453
  %v476 = vpack.c.b16 %v456, %v455
  %v477 = vpack.c.b16 %v458, %v457
  %v478 = vpack.c.b16 %v460, %v459
  %v479 = vpack.c.b16 %v462, %v461
  %v480 = vpack.c.b16 %v464, %v463
  %497 = vmatprep.subr.bf16.mxu0 0
  %498 = vmatpush1.bf16.msra.mxu0 %v465
  %499 = vmatprep.subr.bf16.mxu0 0
  %500 = vmatpush1.bf16.msra.mxu0 %v466
  %501 = vmatprep.subr.bf16.mxu0 0
  %502 = vmatpush1.bf16.msra.mxu0 %v467
  %503 = vmatprep.subr.bf16.mxu0 0
  %504 = vmatpush1.bf16.msra.mxu0 %v468
  %505 = vmatprep.subr.bf16.mxu0 0
  %506 = vmatpush1.bf16.msra.mxu0 %v469
  %507 = vmatprep.subr.bf16.mxu0 0
  %508 = vmatpush1.bf16.msra.mxu0 %v470
  %509 = vmatprep.subr.bf16.mxu0 0
  %510 = vmatpush1.bf16.msra.mxu0 %v471
  %511 = vmatprep.subr.bf16.mxu0 0
  %512 = vmatpush1.bf16.msra.mxu0 %v472
  %513 = vmatprep.subr.bf16.mxu0 0
  %514 = vmatpush1.bf16.msra.mxu0 %v473
  %515 = vmatprep.subr.bf16.mxu0 0
  %516 = vmatpush1.bf16.msra.mxu0 %v474
  %517 = vmatprep.subr.bf16.mxu0 0
  %518 = vmatpush1.bf16.msra.mxu0 %v475
  %519 = vmatprep.subr.bf16.mxu0 0
  %520 = vmatpush1.bf16.msra.mxu0 %v476
  %521 = vmatprep.subr.bf16.mxu0 0
  %522 = vmatpush1.bf16.msra.mxu0 %v477
  %523 = vmatprep.subr.bf16.mxu0 0
  %524 = vmatpush1.bf16.msra.mxu0 %v478
  %525 = vmatprep.subr.bf16.mxu0 0
  %526 = vmatpush1.bf16.msra.mxu0 %v479
  %527 = vmatprep.subr.bf16.mxu0 0
  %528 = vmatpush1.bf16.msra.mxu0 %v480
  %529 = vmatprep.mubr.bf16.mxu0 %v338
  %530 = vmatmul.mubr.bf16.gmra.mrb[0].mxu0 %v337
  %v531 = vpop.f32.mrb[0].mxu0
  %v532 = vadd.f32 %v399, %v531
  %v533 = vpop.f32.mrb[0].mxu0
  %v534 = vpop.f32.mrb[0].mxu0
  %v535 = vadd.f32 %v399, %v534
  %v536 = vpop.f32.mrb[0].mxu0
  %537 = vmatprep.mubr.bf16.mxu0 %v340
  %538 = vmatmul.mubr.bf16.gmra.mrb[0].mxu0 %v339
  %v539 = vpop.f32.mrb[0].mxu0
  %v540 = vadd.f32 %v399, %v539
  %v541 = vpop.f32.mrb[0].mxu0
  %v542 = vpop.f32.mrb[0].mxu0
  %v543 = vadd.f32 %v399, %v542
  %v544 = vpop.f32.mrb[0].mxu0
  %545 = vmatprep.mubr.bf16.mxu0 %v342
  %546 = vmatmul.mubr.bf16.gmra.mrb[0].mxu0 %v341
  %v547 = vpop.f32.mrb[0].mxu0
  %v548 = vadd.f32 %v399, %v547
  %v549 = vpop.f32.mrb[0].mxu0
  %v550 = vpop.f32.mrb[0].mxu0
  %v551 = vadd.f32 %v399, %v550
  %v552 = vpop.f32.mrb[0].mxu0
  %553 = vmatprep.mubr.bf16.mxu0 %v344
  %554 = vmatmul.mubr.bf16.gmra.mrb[0].mxu0 %v343
  %v555 = vpop.f32.mrb[0].mxu0
  %v556 = vadd.f32 %v399, %v555
  %v557 = vpop.f32.mrb[0].mxu0
  %v558 = vpop.f32.mrb[0].mxu0
  %v559 = vadd.f32 %v399, %v558
  %v560 = vpop.f32.mrb[0].mxu0
  %561 = vmatprep.mubr.bf16.mxu0 %v346
  %562 = vmatmul.mubr.bf16.gmra.mrb[0].mxu0 %v345
  %v563 = vpop.f32.mrb[0].mxu0
  %v564 = vadd.f32 %v399, %v563
  %v565 = vpop.f32.mrb[0].mxu0
  %v566 = vpop.f32.mrb[0].mxu0
  %v567 = vadd.f32 %v399, %v566
  %v568 = vpop.f32.mrb[0].mxu0
  %569 = vmatprep.mubr.bf16.mxu0 %v348
  %570 = vmatmul.mubr.bf16.gmra.mrb[0].mxu0 %v347
  %v571 = vpop.f32.mrb[0].mxu0
  %v572 = vadd.f32 %v399, %v571
  %v573 = vpop.f32.mrb[0].mxu0
  %v574 = vpop.f32.mrb[0].mxu0
  %v575 = vadd.f32 %v399, %v574
  %v576 = vpop.f32.mrb[0].mxu0
  %577 = vmatprep.mubr.bf16.mxu0 %v350
  %578 = vmatmul.mubr.bf16.gmra.mrb[0].mxu0 %v349
  %v579 = vpop.f32.mrb[0].mxu0
  %v580 = vadd.f32 %v399, %v579
  %v581 = vpop.f32.mrb[0].mxu0
  %v582 = vpop.f32.mrb[0].mxu0
  %v583 = vadd.f32 %v399, %v582
  %v584 = vpop.f32.mrb[0].mxu0
  %585 = vmatprep.mubr.bf16.mxu0 %v352
  %586 = vmatmul.mubr.bf16.gmra.mrb[0].mxu0 %v351
  %v587 = vpop.f32.mrb[0].mxu0
  %v588 = vadd.f32 %v399, %v587
  %v589 = vpop.f32.mrb[0].mxu0
  %v590 = vpop.f32.mrb[0].mxu0
  %v591 = vadd.f32 %v399, %v590
  %v592 = vpop.f32.mrb[0].mxu0
  %593 = vmatprep.mubr.bf16.mxu0 %v354
  %594 = vmatmul.mubr.bf16.gmra.mrb[0].mxu0 %v353
  %v595 = vpop.f32.mrb[0].mxu0
  %v596 = vadd.f32 %v399, %v595
  %v597 = vpop.f32.mrb[0].mxu0
  %v598 = vpop.f32.mrb[0].mxu0
  %v599 = vadd.f32 %v399, %v598
  %v600 = vpop.f32.mrb[0].mxu0
  %601 = vmatprep.mubr.bf16.mxu0 %v356
  %602 = vmatmul.mubr.bf16.gmra.mrb[0].mxu0 %v355
  %v603 = vpop.f32.mrb[0].mxu0
  %v604 = vadd.f32 %v399, %v603
  %v605 = vpop.f32.mrb[0].mxu0
  %v606 = vpop.f32.mrb[0].mxu0
  %v607 = vadd.f32 %v399, %v606
  %v608 = vpop.f32.mrb[0].mxu0
  %609 = vmatprep.mubr.bf16.mxu0 %v358
  %610 = vmatmul.mubr.bf16.gmra.mrb[0].mxu0 %v357
  %v611 = vpop.f32.mrb[0].mxu0
  %v612 = vadd.f32 %v399, %v611
  %v613 = vpop.f32.mrb[0].mxu0
  %v614 = vpop.f32.mrb[0].mxu0
  %v615 = vadd.f32 %v399, %v614
  %v616 = vpop.f32.mrb[0].mxu0
  %617 = vmatprep.mubr.bf16.mxu0 %v360
  %618 = vmatmul.mubr.bf16.gmra.mrb[0].mxu0 %v359
  %v619 = vpop.f32.mrb[0].mxu0
  %v620 = vadd.f32 %v399, %v619
  %v621 = vpop.f32.mrb[0].mxu0
  %v622 = vpop.f32.mrb[0].mxu0
  %v623 = vadd.f32 %v399, %v622
  %v624 = vpop.f32.mrb[0].mxu0
  %625 = vmatprep.mubr.bf16.mxu0 %v362
  %626 = vmatmul.mubr.bf16.gmra.mrb[0].mxu0 %v361
  %v627 = vpop.f32.mrb[0].mxu0
  %v628 = vadd.f32 %v399, %v627
  %v629 = vpop.f32.mrb[0].mxu0
  %v630 = vpop.f32.mrb[0].mxu0
  %v631 = vpop.f32.mrb[0].mxu0
  %632 = vdwg.mxu0
  %v633 = vmax.f32 %v532, 0.0
  %v634 = vmax.f32 %v535, 0.0
  %v635 = vmax.f32 %v540, 0.0
  %v636 = vmax.f32 %v543, 0.0
  %v637 = vmax.f32 %v548, 0.0
  %v638 = vmax.f32 %v551, 0.0
  %v639 = vmax.f32 %v556, 0.0
  %v640 = vmax.f32 %v559, 0.0
  %v641 = vmax.f32 %v564, 0.0
  %v642 = vmax.f32 %v567, 0.0
  %v643 = vmax.f32 %v572, 0.0
  %v644 = vmax.f32 %v575, 0.0
  %v645 = vmax.f32 %v580, 0.0
  %v646 = vmax.f32 %v583, 0.0
  %v647 = vmax.f32 %v588, 0.0
  %v648 = vmax.f32 %v591, 0.0
  %v649 = vmax.f32 %v596, 0.0
  %v650 = vmax.f32 %v599, 0.0
  %v651 = vmax.f32 %v604, 0.0
  %v652 = vmax.f32 %v607, 0.0
  %v653 = vmax.f32 %v612, 0.0
  %v654 = vmax.f32 %v615, 0.0
  %v655 = vmax.f32 %v620, 0.0
  %v656 = vmax.f32 %v623, 0.0
  %v657 = vmax.f32 %v628, 0.0
  %v658 = vpack.c.bf16 %v634, %v633
  %v659 = vpack.c.bf16 %v636, %v635
  %v660 = vpack.c.bf16 %v638, %v637
  %v661 = vpack.c.bf16 %v640, %v639
  %v662 = vpack.c.bf16 %v642, %v641
  %v663 = vpack.c.bf16 %v644, %v643
  %v664 = vpack.c.bf16 %v646, %v645
  %v665 = vpack.c.bf16 %v648, %v647
  %v666 = vpack.c.bf16 %v650, %v649
  %v667 = vpack.c.bf16 %v652, %v651
  %v668 = vpack.c.bf16 %v654, %v653
  %v669 = vpack.c.bf16 %v656, %v655
  %v670 = vpack.c.bf16 %v657, %v657
  %v671 = vld [vmem:[%s3] sm:$0xf]
  %v672 = vld [vmem:[%s3 + $0x4] sm:$0xf]
  %v673 = vld [vmem:[%s3 + $0x8] sm:$0xf]
  %v674 = vld [vmem:[%s3 + $0xc] sm:$0xf]
  %v675 = vld [vmem:[%s3 + $0x10] sm:$0xf]
  %v676 = vld [vmem:[%s3 + $0x14] sm:$0xf]
  %v677 = vld [vmem:[%s3 + $0x18] sm:$0xf]
  %v678 = vld [vmem:[%s3 + $0x1c] sm:$0xf]
  %v679 = vld [vmem:[%s3 + $0x20] sm:$0xf]
  %v680 = vld [vmem:[%s3 + $0x24] sm:$0xf]
  %v681 = vld [vmem:[%s3 + $0x28] sm:$0xf]
  %v682 = vld [vmem:[%s3 + $0x2c] sm:$0xf]
  %v683 = vld [vmem:[%s3 + $0x30] sm:$0xf]
  %v684 = vld [vmem:[%s3 + $0x34] sm:$0xf]
  %v685 = vld [vmem:[%s3 + $0x38] sm:$0xf]
  %v686 = vld [vmem:[%s3 + $0x3c] sm:$0xf]
  %v688 = vlaneseq
  %v689 = vshrl.u32 %v688, 7
  %v690 = vsub.s32 0, %v689
  %v691 = vrot.slane %v61, %v690
  %v709 = vunpack.c.l.b16 %v671
  %v710 = vunpack.c.l.b16 %v672
  %v711 = vunpack.c.l.b16 %v673
  %v712 = vunpack.c.l.b16 %v674
  %v713 = vunpack.c.l.b16 %v675
  %v714 = vunpack.c.l.b16 %v676
  %v715 = vunpack.c.l.b16 %v677
  %v716 = vunpack.c.l.b16 %v678
  %v717 = vunpack.c.l.b16 %v679
  %v718 = vunpack.c.l.b16 %v680
  %v719 = vunpack.c.l.b16 %v681
  %v720 = vunpack.c.l.b16 %v682
  %v721 = vunpack.c.l.b16 %v683
  %v722 = vunpack.c.l.b16 %v684
  %v723 = vunpack.c.l.b16 %v685
  %v724 = vunpack.c.l.b16 %v686
  %v725 = vpack.c.b16 %v710, %v709
  %v726 = vpack.c.b16 %v712, %v711
  %v727 = vpack.c.b16 %v714, %v713
  %v728 = vpack.c.b16 %v716, %v715
  %v729 = vpack.c.b16 %v718, %v717
  %v730 = vpack.c.b16 %v720, %v719
  %v731 = vpack.c.b16 %v722, %v721
  %v732 = vpack.c.b16 %v724, %v723
  %741 = vmatprep.subr.bf16.mxu0 0
  %742 = vmatpush1.bf16.msra.mxu0 %v725
  %743 = vmatprep.subr.bf16.mxu0 0
  %744 = vmatpush1.bf16.msra.mxu0 %v726
  %745 = vmatprep.subr.bf16.mxu0 0
  %746 = vmatpush1.bf16.msra.mxu0 %v727
  %747 = vmatprep.subr.bf16.mxu0 0
  %748 = vmatpush1.bf16.msra.mxu0 %v728
  %749 = vmatprep.subr.bf16.mxu0 0
  %750 = vmatpush1.bf16.msra.mxu0 %v729
  %751 = vmatprep.subr.bf16.mxu0 0
  %752 = vmatpush1.bf16.msra.mxu0 %v730
  %753 = vmatprep.subr.bf16.mxu0 0
  %754 = vmatpush1.bf16.msra.mxu0 %v731
  %755 = vmatprep.subr.bf16.mxu0 0
  %756 = vmatpush1.bf16.msra.mxu0 %v732
  %757 = vmatprep.subr.bf16.mxu0 0
  %758 = vmatpush1.bf16.msra.mxu0 0
  %759 = vmatprep.subr.bf16.mxu0 0
  %760 = vmatpush1.bf16.msra.mxu0 0
  %761 = vmatprep.subr.bf16.mxu0 0
  %762 = vmatpush1.bf16.msra.mxu0 0
  %763 = vmatprep.subr.bf16.mxu0 0
  %764 = vmatpush1.bf16.msra.mxu0 0
  %765 = vmatprep.subr.bf16.mxu0 0
  %766 = vmatpush1.bf16.msra.mxu0 0
  %767 = vmatprep.subr.bf16.mxu0 0
  %768 = vmatpush1.bf16.msra.mxu0 0
  %769 = vmatprep.subr.bf16.mxu0 0
  %770 = vmatpush1.bf16.msra.mxu0 0
  %771 = vmatprep.subr.bf16.mxu0 0
  %772 = vmatpush1.bf16.msra.mxu0 0
  %773 = vmatprep.mubr.bf16.mxu0 0
  %774 = vmatmul.mubr.bf16.gmra.mrb[0].mxu0 %v658
  %v775 = vpop.f32.mrb[0].mxu0
  %v776 = vadd.f32 %v691, %v775
  %v777 = vpop.f32.mrb[0].mxu0
  %v778 = vpop.f32.mrb[0].mxu0
  %v779 = vadd.f32 %v691, %v778
  %v780 = vpop.f32.mrb[0].mxu0
  %781 = vmatprep.mubr.bf16.mxu0 0
  %782 = vmatmul.mubr.bf16.gmra.mrb[0].mxu0 %v659
  %v783 = vpop.f32.mrb[0].mxu0
  %v784 = vadd.f32 %v691, %v783
  %v785 = vpop.f32.mrb[0].mxu0
  %v786 = vpop.f32.mrb[0].mxu0
  %v787 = vadd.f32 %v691, %v786
  %v788 = vpop.f32.mrb[0].mxu0
  %789 = vmatprep.mubr.bf16.mxu0 0
  %790 = vmatmul.mubr.bf16.gmra.mrb[0].mxu0 %v660
  %v791 = vpop.f32.mrb[0].mxu0
  %v792 = vadd.f32 %v691, %v791
  %v793 = vpop.f32.mrb[0].mxu0
  %v794 = vpop.f32.mrb[0].mxu0
  %v795 = vadd.f32 %v691, %v794
  %v796 = vpop.f32.mrb[0].mxu0
  %797 = vmatprep.mubr.bf16.mxu0 0
  %798 = vmatmul.mubr.bf16.gmra.mrb[0].mxu0 %v661
  %v799 = vpop.f32.mrb[0].mxu0
  %v800 = vadd.f32 %v691, %v799
  %v801 = vpop.f32.mrb[0].mxu0
  %v802 = vpop.f32.mrb[0].mxu0
  %v803 = vadd.f32 %v691, %v802
  %v804 = vpop.f32.mrb[0].mxu0
  %805 = vmatprep.mubr.bf16.mxu0 0
  %806 = vmatmul.mubr.bf16.gmra.mrb[0].mxu0 %v662
  %v807 = vpop.f32.mrb[0].mxu0
  %v808 = vadd.f32 %v691, %v807
  %v809 = vpop.f32.mrb[0].mxu0
  %v810 = vpop.f32.mrb[0].mxu0
  %v811 = vadd.f32 %v691, %v810
  %v812 = vpop.f32.mrb[0].mxu0
  %813 = vmatprep.mubr.bf16.mxu0 0
  %814 = vmatmul.mubr.bf16.gmra.mrb[0].mxu0 %v663
  %v815 = vpop.f32.mrb[0].mxu0
  %v816 = vadd.f32 %v691, %v815
  %v817 = vpop.f32.mrb[0].mxu0
  %v818 = vpop.f32.mrb[0].mxu0
  %v819 = vadd.f32 %v691, %v818
  %v820 = vpop.f32.mrb[0].mxu0
  %821 = vmatprep.mubr.bf16.mxu0 0
  %822 = vmatmul.mubr.bf16.gmra.mrb[0].mxu0 %v664
  %v823 = vpop.f32.mrb[0].mxu0
  %v824 = vadd.f32 %v691, %v823
  %v825 = vpop.f32.mrb[0].mxu0
  %v826 = vpop.f32.mrb[0].mxu0
  %v827 = vadd.f32 %v691, %v826
  %v828 = vpop.f32.mrb[0].mxu0
  %829 = vmatprep.mubr.bf16.mxu0 0
  %830 = vmatmul.mubr.bf16.gmra.mrb[0].mxu0 %v665
  %v831 = vpop.f32.mrb[0].mxu0
  %v832 = vadd.f32 %v691, %v831
  %v833 = vpop.f32.mrb[0].mxu0
  %v834 = vpop.f32.mrb[0].mxu0
  %v835 = vadd.f32 %v691, %v834
  %v836 = vpop.f32.mrb[0].mxu0
  %837 = vmatprep.mubr.bf16.mxu0 0
  %838 = vmatmul.mubr.bf16.gmra.mrb[0].mxu0 %v666
  %v839 = vpop.f32.mrb[0].mxu0
  %v840 = vadd.f32 %v691, %v839
  %v841 = vpop.f32.mrb[0].mxu0
  %v842 = vpop.f32.mrb[0].mxu0
  %v843 = vadd.f32 %v691, %v842
  %v844 = vpop.f32.mrb[0].mxu0
  %845 = vmatprep.mubr.bf16.mxu0 0
  %846 = vmatmul.mubr.bf16.gmra.mrb[0].mxu0 %v667
  %v847 = vpop.f32.mrb[0].mxu0
  %v848 = vadd.f32 %v691, %v847
  %v849 = vpop.f32.mrb[0].mxu0
  %v850 = vpop.f32.mrb[0].mxu0
  %v851 = vadd.f32 %v691, %v850
  %v852 = vpop.f32.mrb[0].mxu0
  %853 = vmatprep.mubr.bf16.mxu0 0
  %854 = vmatmul.mubr.bf16.gmra.mrb[0].mxu0 %v668
  %v855 = vpop.f32.mrb[0].mxu0
  %v856 = vadd.f32 %v691, %v855
  %v857 = vpop.f32.mrb[0].mxu0
  %v858 = vpop.f32.mrb[0].mxu0
  %v859 = vadd.f32 %v691, %v858
  %v860 = vpop.f32.mrb[0].mxu0
  %861 = vmatprep.mubr.bf16.mxu0 0
  %862 = vmatmul.mubr.bf16.gmra.mrb[0].mxu0 %v669
  %v863 = vpop.f32.mrb[0].mxu0
  %v864 = vadd.f32 %v691, %v863
  %v865 = vpop.f32.mrb[0].mxu0
  %v866 = vpop.f32.mrb[0].mxu0
  %v867 = vadd.f32 %v691, %v866
  %v868 = vpop.f32.mrb[0].mxu0
  %869 = vmatprep.mubr.bf16.mxu0 0
  %870 = vmatmul.mubr.bf16.gmra.mrb[0].mxu0 %v670
  %v871 = vpop.f32.mrb[0].mxu0
  %v872 = vadd.f32 %v691, %v871
  %v873 = vpop.f32.mrb[0].mxu0
  %v874 = vpop.f32.mrb[0].mxu0
  %v875 = vpop.f32.mrb[0].mxu0
  %876 = vdwg.mxu0
  %877 = vst.msk [vmem:[%s5] sm:$0xff] %vm79, %v776
  %878 = vst.msk [vmem:[%s5 + $0x8] sm:$0xff] %vm79, %v779
  %879 = vst.msk [vmem:[%s5 + $0x10] sm:$0xff] %vm79, %v784
  %880 = vst.msk [vmem:[%s5 + $0x18] sm:$0xff] %vm79, %v787
  %881 = vst.msk [vmem:[%s5 + $0x20] sm:$0xff] %vm79, %v792
  %882 = vst.msk [vmem:[%s5 + $0x28] sm:$0xff] %vm79, %v795
  %883 = vst.msk [vmem:[%s5 + $0x30] sm:$0xff] %vm79, %v800
  %884 = vst.msk [vmem:[%s5 + $0x38] sm:$0xff] %vm79, %v803
  %885 = vst.msk [vmem:[%s5 + $0x40] sm:$0xff] %vm79, %v808
  %886 = vst.msk [vmem:[%s5 + $0x48] sm:$0xff] %vm79, %v811
  %887 = vst.msk [vmem:[%s5 + $0x50] sm:$0xff] %vm79, %v816
  %888 = vst.msk [vmem:[%s5 + $0x58] sm:$0xff] %vm79, %v819
  %889 = vst.msk [vmem:[%s5 + $0x60] sm:$0xff] %vm79, %v824
  %890 = vst.msk [vmem:[%s5 + $0x68] sm:$0xff] %vm79, %v827
  %891 = vst.msk [vmem:[%s5 + $0x70] sm:$0xff] %vm79, %v832
  %892 = vst.msk [vmem:[%s5 + $0x78] sm:$0xff] %vm79, %v835
  %893 = vst.msk [vmem:[%s5 + $0x80] sm:$0xff] %vm79, %v840
  %894 = vst.msk [vmem:[%s5 + $0x88] sm:$0xff] %vm79, %v843
  %895 = vst.msk [vmem:[%s5 + $0x90] sm:$0xff] %vm79, %v848
  %896 = vst.msk [vmem:[%s5 + $0x98] sm:$0xff] %vm79, %v851
  %897 = vst.msk [vmem:[%s5 + $0xa0] sm:$0xff] %vm79, %v856
  %898 = vst.msk [vmem:[%s5 + $0xa8] sm:$0xff] %vm79, %v859
  %899 = vst.msk [vmem:[%s5 + $0xb0] sm:$0xff] %vm79, %v864
  %900 = vst.msk [vmem:[%s5 + $0xb8] sm:$0xff] %vm79, %v867
  %901 = vst.msk [vmem:[%s5 + $0xc0] sm:$0xff] %vm79, %v872
  // Predicated region
  $region22: #{_lambda_.1} parent=0 // pred_check
    _
  $region23: #{_lambda_.1} parent=0 // pred_check_branch
    %903 = sbr.rel (0) target = $region25
  $region24: #{_lambda_.1} parent=0 // pred_region
    _
  $region25: #{_lambda_.1} parent=0 // pred_fallthru
    _
  // Predicated region
  $region26: #{_lambda_.1} parent=0 // pred_check
    _
  $region27: #{_lambda_.1} parent=0 // pred_check_branch
    %905 = sbr.rel (0) target = $region29
  $region28: #{_lambda_.1} parent=0 // pred_region
    _
  $region29: #{_lambda_.1} parent=0 // pred_fallthru
    _

</llo_original>
